<compile_context>
chip_gen: v7x
topology: tpu7x:2x2x1
jax: 0.10.0
libtpu: 0.0.40
codegen_flags: <defaults>
</compile_context>

<pallas_src>
import math

import jax
import jax.numpy as jnp
from jax.experimental import pallas as pl
from jax.experimental.pallas import tpu as pltpu


def make_sinusoidal_encoding(model: int, max_sequence_length: int,
                             dtype=jnp.float32) -> jnp.ndarray:
    """Deterministic buffer init matching the PyTorch __init__ exactly.

    Returned shape is (max_seq, D); the PyTorch leading broadcast-batch axis is
    handled inside the Pallas kernel instead.
    """
    position = jnp.arange(0, max_sequence_length, dtype=jnp.float32)[:, None]   # (L, 1)
    divided_term = jnp.exp(
        jnp.arange(0, model, 2, dtype=jnp.float32) * (-(math.log(10000.0) / model))
    )                                                                            # (D/2,)
    angles = position * divided_term                                             # (L, D/2)
    enc = jnp.zeros((max_sequence_length, model), dtype=jnp.float32)
    enc = enc.at[:, 0::2].set(jnp.sin(angles))
    enc = enc.at[:, 1::2].set(jnp.cos(angles))
    return enc.astype(dtype)                                                     # (L, D)


def _add_pe_kernel(x_ref, pe_ref, o_ref):
    # x_ref / o_ref: (tb, ts, D) slabs; pe_ref: (ts, D).
    # Pure VPU add; the PE vregs are loaded once and broadcast across the
    # (untiled) leading batch-tile dim — no cross-lane work, no reshapes.
    o_ref[...] = x_ref[...] + pe_ref[...][None, :, :]


# Live VMEM ≈ 2×(x tile) + 2×(out tile) + 2×(PE tile) with default double-buffering.
# 24 MiB target is safe on v5e/v6e (128 MiB phys) and v7x (64 MiB phys).
_TILE_VMEM_BUDGET = 24 * 1024 * 1024
_VMEM_LIMIT_BYTES = 48 * 1024 * 1024   # scoped-VMEM cap with headroom, OK on all gens


def _choose_tiles(B: int, S: int, D: int, itemsize: int) -> tuple[int, int]:
    """Pick (tb, ts): batch-tile and sequence-tile sizes.

    Live bytes ≈ (4*tb + 2) * ts * D * itemsize.  First maximise ts (multiple of
    8 rows, ≤ S) at tb=1; if the whole sequence fits in one tile, grow tb to cut
    grid steps and reuse each PE DMA across more batches.
    """
    row_bytes = max(1, D * itemsize)
    max_rows = _TILE_VMEM_BUDGET // (6 * row_bytes)          # ts budget at tb=1
    if S < 8:
        ts = S
    elif max_rows <= 8:
        ts = 8                                               # floor; vmem_limit has headroom
    else:
        ts = min(S, (max_rows // 8) * 8)

    tb = 1
    if ts >= S:                                              # whole sequence per tile
        ts = S
        tb = (_TILE_VMEM_BUDGET // (max(1, S * row_bytes)) - 2) // 4
        tb = int(max(1, min(B, tb)))
    return tb, ts


def positional_encoding_forward(x: jnp.ndarray, encoding: jnp.ndarray,
                                *, donate_x: bool = False) -> jnp.ndarray:
    """x: (B, S, D); encoding: (max_seq, D) or (1, max_seq, D). Returns x + encoding[:S]."""
    if encoding.ndim == 3:
        encoding = encoding[0]                 # squeeze PyTorch-style leading 1 (metadata only)
    if encoding.dtype != x.dtype:
        encoding = encoding.astype(x.dtype)    # no-op when the table is stored in model dtype

    B, S, D = x.shape
    tb, ts = _choose_tiles(B, S, D, x.dtype.itemsize)

    pe = encoding
    if ts % 8 != 0 and ts != pe.shape[0]:
        # Tiny / ragged S (ts == S, not a multiple of 8): make the PE block equal
        # the full array dims so the (8, 128)-divisibility rule is satisfied.
        pe = encoding[:S]

    # Grid order (s_tiles, b_tiles): PE block index is constant along the inner
    # (batch) axis, so its tile is DMA'd once per s-tile and reused across batches.
    grid = (pl.cdiv(S, ts), pl.cdiv(B, tb))

    call_kwargs = {}
    if donate_x:
        call_kwargs["input_output_aliases"] = {0: 0}   # reuse x's HBM buffer for the output

    # TODO(synk): for small / non-128-multiple D, a lane-dense reshape of the output
    # (fold D into the lane axis) would avoid masked partial stores; for real model
    # dims (D % 128 == 0) the output is already lane-dense.
    return pl.pallas_call(
        _add_pe_kernel,
        out_shape=jax.ShapeDtypeStruct((B, S, D), x.dtype),
        grid_spec=pltpu.PrefetchScalarGridSpec(
            num_scalar_prefetch=0,
            grid=grid,
            in_specs=[
                # x: one (tb, ts, D) slab per grid step.
                pl.BlockSpec((tb, ts, D), lambda s, b: (b, s, 0)),
                # PE table: same S-tile as x, shared by every batch in the slab.
                pl.BlockSpec((ts, D), lambda s, b: (s, 0)),
            ],
            out_specs=pl.BlockSpec((tb, ts, D), lambda s, b: (b, s, 0)),
        ),
        compiler_params=pltpu.CompilerParams(
            dimension_semantics=("parallel", "parallel"),
            vmem_limit_bytes=_VMEM_LIMIT_BYTES,
        ),
        **call_kwargs,
    )(x, pe)


if __name__ == "__main__":
    # Small shapes consistent with the module's forward: (batch, seq, model)
    batch, seq, model, max_seq = 2, 8, 32, 16

    key = jax.random.PRNGKey(0)
    x = jax.random.normal(key, (batch, seq, model), dtype=jnp.float32)
    encoding = make_sinusoidal_encoding(model, max_seq, dtype=x.dtype)   # (16, 32)

    out = positional_encoding_forward(x, encoding)
    out = jax.block_until_ready(out)

    ref = x + encoding[None, :seq, :]
    assert out.shape == (batch, seq, model)
    assert jnp.allclose(out, ref, atol=1e-6, rtol=1e-6)

    # Second check: ragged sequence length (S % 8 != 0) exercises the full-array
    # PE-block fallback and a batch-tile > 1.
    x2 = jax.random.normal(jax.random.PRNGKey(1), (3, 5, model), dtype=jnp.float32)
    out2 = jax.block_until_ready(positional_encoding_forward(x2, encoding))
    ref2 = x2 + encoding[None, :5, :]
    assert jnp.allclose(out2, ref2, atol=1e-6, rtol=1e-6)

    print("KERNEL_OK")
</pallas_src>

<mosaic_0001>
module attributes {stable_mosaic.version = 11 : i64} {
  func.func @_add_pe_kernel(%arg0: i32, %arg1: i32, %arg2: memref<2x8x32xf32, #tpu.memory_space<vmem>>, %arg3: memref<8x32xf32, #tpu.memory_space<vmem>>, %arg4: memref<2x8x32xf32, #tpu.memory_space<vmem>>) attributes {dimension_semantics = [#tpu.dimension_semantics<parallel>, #tpu.dimension_semantics<parallel>], iteration_bounds = array<i64: 1, 1>, scalar_prefetch = 0 : i64, scratch_operands = 0 : i64, tpu.core_type = #tpu.core_type<tc>, window_params = [{transform_indices = @transform_0, window_bounds = array<i64: 2, 8, 32>}, {transform_indices = @transform_1, window_bounds = array<i64: 8, 32>}, {transform_indices = @transform_2, window_bounds = array<i64: 2, 8, 32>}]} {
    %c0 = arith.constant 0 : index
    %c0_0 = arith.constant 0 : index
    %c0_1 = arith.constant 0 : index
    %0 = vector.load %arg2[%c0, %c0_0, %c0_1] : memref<2x8x32xf32, #tpu.memory_space<vmem>>, vector<2x8x32xf32>
    %c0_2 = arith.constant 0 : index
    %c0_3 = arith.constant 0 : index
    %1 = vector.load %arg3[%c0_2, %c0_3] : memref<8x32xf32, #tpu.memory_space<vmem>>, vector<8x32xf32>
    %2 = vector.shape_cast %1 : vector<8x32xf32> to vector<1x8x32xf32>
    %3 = vector.broadcast %2 : vector<1x8x32xf32> to vector<2x8x32xf32>
    %4 = arith.addf %0, %3 : vector<2x8x32xf32>
    %c0_4 = arith.constant 0 : index
    %c0_5 = arith.constant 0 : index
    %c0_6 = arith.constant 0 : index
    %5 = vector.load %arg4[%c0_4, %c0_5, %c0_6] : memref<2x8x32xf32, #tpu.memory_space<vmem>>, vector<2x8x32xf32>
    tpu.vector_store %arg4[%c0_4, %c0_5, %c0_6], %4 {strides = array<i32>} : memref<2x8x32xf32, #tpu.memory_space<vmem>>, vector<2x8x32xf32>,
    return
  }
  func.func @transform_0(%arg0: i32, %arg1: i32) -> (i32, i32, i32) {
    %c0_i32 = arith.constant 0 : i32
    %c0_i32_0 = arith.constant 0 : i32
    return %arg1, %arg0, %c0_i32 : i32, i32, i32
  }
  func.func @transform_1(%arg0: i32, %arg1: i32) -> (i32, i32) {
    %c0_i32 = arith.constant 0 : i32
    %c0_i32_0 = arith.constant 0 : i32
    return %arg0, %c0_i32 : i32, i32
  }
  func.func @transform_2(%arg0: i32, %arg1: i32) -> (i32, i32, i32) {
    %c0_i32 = arith.constant 0 : i32
    %c0_i32_0 = arith.constant 0 : i32
    return %arg1, %arg0, %c0_i32 : i32, i32, i32
  }
}

</mosaic_0001>

<llo_original>
// kernel: tpu_custom_call.1
$region0: #{tpu_custom_call.1}
  #allocation0 [shape = 'u32[]', space=smem, size = 0x4, offset = 0x4, fixed_abs, tag = 'smem constant byte address 0x4 - core index']
  #allocation1 [shape = 'u32[144,128]{1,0:T(1,128)}', space=vmem, size = 0x12000, scoped, tag = 'internal scratch']
  %s0 = inlined_call_operand.hbm [shape: f32[2,8,32], index: 0, kind: input, shape index: {}]
  %s1 = inlined_call_operand.hbm [shape: f32[16,32], index: 1, kind: input, shape index: {}]
  %s2 = inlined_call_operand.hbm [shape: f32[2,8,32], index: 2, kind: output, shape index: {}]
  %s3 = sld [smem:[#allocation0]]
  $region26: #{tpu_custom_call.1} parent=0
    _
  %s5 = ssub.s32 1, %s3
  %s6 = scalar_select 0, %s5, %s3
  $region1: #{tpu_custom_call.1} parent=0
    #allocation2 [shape = 'u8[8192]{0}', space=vmem, size = 0x2000, scoped, tag = 'input window, operand 0, single buffered']
    #allocation3 [shape = 's32[1]{0}', space=sflag, size = 0x4, scoped, tag = 'scoped memory for tpu_custom_call.1']
    #allocation4 [shape = 's32[1]{0}', space=sflag, size = 0x4, scoped, tag = 'scoped memory for tpu_custom_call.1']
    #allocation5 [shape = 'u8[4096]{0}', space=vmem, size = 0x1000, scoped, tag = 'input window, operand 1, single buffered']
    #allocation6 [shape = 's32[1]{0}', space=sflag, size = 0x4, scoped, tag = 'scoped memory for tpu_custom_call.1']
    #allocation7 [shape = 'u8[8192]{0}', space=vmem, size = 0x2000, scoped, tag = 'output window, operand 0, single buffered']
    %7 = vsyncpa [#allocation3], 0
    %8 = vsyncpa [#allocation6], 0
    %9 = vsyncpa [#allocation4], 0
    // Predicated region
    $region2: #{tpu_custom_call.1} parent=1 // pred_check
      _
    $region3: #{tpu_custom_call.1} parent=1 // pred_check_branch
      %11 = sbr.rel (0) target = $region5
    $region4: #{tpu_custom_call.1} parent=1 // pred_region
      %s13 = ssub.s32 256, 256
      %14 = vsyncadd [#allocation3], %s13
      %s15 = sshll.u32 [#allocation2], 4
      %s16 = int_to_ptr.vmem [resolvable:$true] %s15
      %21 = dma.hbm_to_vmem [thread:$0]  %s0, 256, %s16, [#allocation3], 128, 128, 8
    $region5: #{tpu_custom_call.1} parent=1 // pred_fallthru
      _
    // Predicated region
    $region6: #{tpu_custom_call.1} parent=1 // pred_check
      _
    $region7: #{tpu_custom_call.1} parent=1 // pred_check_branch
      %23 = sbr.rel (0) target = $region9
    $region8: #{tpu_custom_call.1} parent=1 // pred_region
      %s25 = ssub.s32 128, 128
      %26 = vsyncadd [#allocation6], %s25
      %s28 = sshll.u32 [#allocation5], 4
      %s29 = int_to_ptr.vmem [resolvable:$true] %s28
      %31 = dma.hbm_to_vmem [thread:$0]  %s1, 128, %s29, [#allocation6]
    $region9: #{tpu_custom_call.1} parent=1 // pred_fallthru
      _
    // Predicated region
    $region10: #{tpu_custom_call.1} parent=1 // pred_check
      _
    $region11: #{tpu_custom_call.1} parent=1 // pred_check_branch
      %33 = sbr.rel (0) target = $region13
    $region12: #{tpu_custom_call.1} parent=1 // pred_region
      %34 = dma.done [#allocation3], 256
    $region13: #{tpu_custom_call.1} parent=1 // pred_fallthru
      _
    // Predicated region
    $region14: #{tpu_custom_call.1} parent=1 // pred_check
      _
    $region15: #{tpu_custom_call.1} parent=1 // pred_check_branch
      %36 = sbr.rel (0) target = $region17
    $region16: #{tpu_custom_call.1} parent=1 // pred_region
      %37 = dma.done [#allocation6], 128
    $region17: #{tpu_custom_call.1} parent=1 // pred_fallthru
      _
    %v38 = vld [vmem:[#allocation2] sm:$0xff]
    %v39 = vld [vmem:[#allocation2 + $0x8] sm:$0xff]
    %v40 = vld [vmem:[#allocation5] sm:$0xff]
    %v41 = vadd.f32 %v38, %v40
    %v42 = vadd.f32 %v39, %v40
    %vm43 = vcmask 261120
    %44 = vst.msk [vmem:[#allocation7] sm:$0xff] %vm43, %v41
    %45 = vst.msk [vmem:[#allocation7 + $0x8] sm:$0xff] %vm43, %v42
    // Predicated region
    $region18: #{tpu_custom_call.1} parent=1 // pred_check
      _
    $region19: #{tpu_custom_call.1} parent=1 // pred_check_branch
      %47 = sbr.rel (0) target = $region21
    $region20: #{tpu_custom_call.1} parent=1 // pred_region
      %s49 = ssub.s32 256, 256
      %50 = vsyncadd [#allocation4], %s49
      %s51 = sshll.u32 [#allocation7], 4
      %s52 = int_to_ptr.vmem [resolvable:$true] %s51
      %57 = dma.vmem_to_hbm [thread:$0]  %s52, 256, %s2, [#allocation4], 128, 128, 8
    $region21: #{tpu_custom_call.1} parent=1 // pred_fallthru
      _
    // Predicated region
    $region22: #{tpu_custom_call.1} parent=1 // pred_check
      _
    $region23: #{tpu_custom_call.1} parent=1 // pred_check_branch
      %59 = sbr.rel (0) target = $region25
    $region24: #{tpu_custom_call.1} parent=1 // pred_region
      %60 = dma.done [#allocation4], 256
    $region25: #{tpu_custom_call.1} parent=1 // pred_fallthru
      _
    %61 = vsyncpa [#allocation3], 1
    %62 = vsyncpa [#allocation6], 1
    %63 = vsyncpa [#allocation4], 1

</llo_original>
